<compile_context>
chip_gen: v6e
topology: v6e:2x2x1
jax: 0.10.0
libtpu: 0.0.40
codegen_flags: <defaults>
</compile_context>

<pallas_src>
import jax
import jax.numpy as jnp
from jax.experimental import pallas as pl
from jax.experimental.pallas import tpu as pltpu


# Packed parameter slab layout, shape (32, 16) f32 (feature-major / transposed):
#   rows  0:16, cols 0: 8 -> w1.T (16, 8)
#   rows  0:16, col  8    -> b1 as a column (16, 1)
#   rows  0: 8, col  9    -> b2 as a column (8, 1)
#   row   0,    col 10    -> b3 (1, 1)
#   rows 16:24, cols 0:16 -> w2.T (8, 16)
#   row  24,    cols 0: 8 -> w3.T (1, 8)
PARAM_ROWS = 32
PARAM_COLS = 16


def pack_params(w1, b1, w2, b2, w3, b3):
    p = jnp.zeros((PARAM_ROWS, PARAM_COLS), jnp.float32)
    p = p.at[0:16, 0:8].set(w1.T)
    p = p.at[0:16, 8:9].set(b1.reshape(16, 1))
    p = p.at[0:8, 9:10].set(b2.reshape(8, 1))
    p = p.at[0:1, 10:11].set(b3.reshape(1, 1))
    p = p.at[16:24, 0:16].set(w2.T)
    p = p.at[24:25, 0:8].set(w3.T)
    return p


def mlp_kernel(x_ref, p_ref, o_ref):
    # Static slices of the VMEM-resident parameter slab (no extra DMAs).
    w1t = p_ref[0:16, 0:8]      # (16, 8)  = w1.T
    w2t = p_ref[16:24, 0:16]    # (8, 16)  = w2.T
    w3t = p_ref[24:25, 0:8]     # (1, 8)   = w3.T
    b1c = p_ref[0:16, 8:9]      # (16, 1)
    b2c = p_ref[0:8, 9:10]      # (8, 1)
    b3c = p_ref[0:1, 10:11]     # (1, 1)

    x = x_ref[...]              # (TB, 8), batch on sublanes (HBM row-major)

    # Feature-major network: every intermediate is lane-dense (batch on lanes).
    # Layer 1: (16, TB) = w1.T @ x.T, expressed as a trans-B matmul
    # (contract the last dim of both operands -> MXU-native, no relayout).
    h1t = jax.lax.dot_general(
        w1t, x, dimension_numbers=(((1,), (1,)), ((), ())),
        preferred_element_type=jnp.float32)                     # (16, TB)
    h1t = jnp.maximum(h1t + b1c, 0.0)

    # Layer 2: plain (M,K)x(K,N) matmul.
    h2t = jax.lax.dot_general(
        w2t, h1t, dimension_numbers=(((1,), (0,)), ((), ())),
        preferred_element_type=jnp.float32)                     # (8, TB)
    h2t = jnp.maximum(h2t + b2c, 0.0)

    # Layer 3.
    z = jax.lax.dot_general(
        w3t, h2t, dimension_numbers=(((1,), (0,)), ((), ())),
        preferred_element_type=jnp.float32) + b3c               # (1, TB)

    # sigmoid(z): exp -> EUP, approximate reciprocal -> EUP; VALU stays free.
    e = jnp.exp(-z)
    o_ref[...] = pl.reciprocal(1.0 + e, approx=True).astype(o_ref.dtype)


def _round_up(n, m):
    return ((n + m - 1) // m) * m


def mlp_forward(x, params, *, tb=8192):
    """x: (B, 8) f32; params: packed (32, 16) slab.  Returns (B, 1) f32."""
    B = x.shape[0]

    if B <= 512:
        # Single full-array block: block dims equal the array dims, so no
        # alignment / edge-masking / padding is needed; grid = 1.
        tb_eff = B
    else:
        # Partial blocks allowed -> tile must be a multiple of 128 (lane-dense
        # output) and of 8 (x sublanes).  Target >= 2 grid steps so both v7x
        # TensorCores get work; cap at `tb` (VMEM budget, see header).
        tb_eff = min(_round_up(tb, 128), _round_up(pl.cdiv(B, 2), 128))
    grid = pl.cdiv(B, tb_eff)

    cost = pl.CostEstimate(
        flops=B * (2 * 8 * 16 + 2 * 16 * 8 + 2 * 8 + 16 + 8 + 1),
        transcendentals=2 * B,
        bytes_accessed=B * 8 * 4 + PARAM_ROWS * PARAM_COLS * 4 + B * 4,
    )

    y_t = pl.pallas_call(
        mlp_kernel,
        out_shape=jax.ShapeDtypeStruct((1, B), jnp.float32),
        grid=(grid,),
        in_specs=[
            # x tile: pipelined / double-buffered across the batch grid.  The
            # last block may be partial; Pallas masks it (rows independent).
            pl.BlockSpec((tb_eff, 8), lambda i: (i, 0)),
            # Packed params: constant block index -> stays VMEM-resident.
            pl.BlockSpec((PARAM_ROWS, PARAM_COLS), lambda i: (0, 0)),
        ],
        # Lane-dense output slab: batch on the 128-lane axis.
        out_specs=pl.BlockSpec((1, tb_eff), lambda i: (0, i)),
        compiler_params=pltpu.CompilerParams(
            dimension_semantics=("parallel",),
        ),
        cost_estimate=cost,
    )(x, params)

    # (1, B) -> (B, 1); contiguous reshape, no data movement.
    return jnp.reshape(y_t, (B, 1))


def init_linear(key, in_f, out_f):
    # PyTorch nn.Linear default init: U(-1/sqrt(in_f), 1/sqrt(in_f))
    kw, kb = jax.random.split(key)
    bound = 1.0 / jnp.sqrt(float(in_f))
    w = jax.random.uniform(kw, (in_f, out_f), jnp.float32, -bound, bound)
    b = jax.random.uniform(kb, (out_f,), jnp.float32, -bound, bound)
    return w, b


def _ref_forward(x, w1, b1, w2, b2, w3, b3):
    h = jnp.maximum(x @ w1 + b1, 0.0)
    h = jnp.maximum(h @ w2 + b2, 0.0)
    return 1.0 / (1.0 + jnp.exp(-(h @ w3 + b3)))


if __name__ == "__main__":
    key = jax.random.PRNGKey(0)
    kx, kx2, k1, k2, k3 = jax.random.split(key, 5)

    w1, b1 = init_linear(k1, 8, 16)
    w2, b2 = init_linear(k2, 16, 8)
    w3, b3 = init_linear(k3, 8, 1)
    params = pack_params(w1, b1, w2, b2, w3, b3)  # once, outside the hot path

    # Tolerance is loosened vs f32-exact because the final sigmoid uses the
    # EUP approximate reciprocal; sigmoid outputs lie in (0, 1) so 1e-2 abs
    # still catches any packing / transpose / layout bug (those are O(0.1+)).
    TOL = 1e-2

    # Small batch (single full-array block path), matches the torch module's
    # (B, 8) -> (B, 1) contract.
    batch = 8
    x = jax.random.normal(kx, (batch, 8), jnp.float32)
    y = jax.block_until_ready(mlp_forward(x, params))
    y_ref = _ref_forward(x, w1, b1, w2, b2, w3, b3)
    assert y.shape == (batch, 1)
    assert jnp.allclose(y, y_ref, atol=TOL, rtol=TOL)

    # Larger, non-tile-multiple batch: exercises the multi-step grid
    # (2 steps -> both v7x TensorCores) and the masked partial edge block
    # (no jnp.pad pass over x).
    batch2 = 700
    x2 = jax.random.normal(kx2, (batch2, 8), jnp.float32)
    y2 = jax.block_until_ready(mlp_forward(x2, params))
    y2_ref = _ref_forward(x2, w1, b1, w2, b2, w3, b3)
    assert y2.shape == (batch2, 1)
    assert jnp.allclose(y2, y2_ref, atol=TOL, rtol=TOL)

    print("KERNEL_OK")
</pallas_src>

<mosaic_0001>
module attributes {stable_mosaic.version = 11 : i64} {
  func.func @mlp_kernel(%arg0: i32, %arg1: memref<8x8xf32, #tpu.memory_space<vmem>>, %arg2: memref<32x16xf32, #tpu.memory_space<vmem>>, %arg3: memref<1x8xf32, #tpu.memory_space<vmem>>) attributes {dimension_semantics = [#tpu.dimension_semantics<parallel>], iteration_bounds = array<i64: 1>, scalar_prefetch = 0 : i64, scratch_operands = 0 : i64, tpu.core_type = #tpu.core_type<tc>, window_params = [{transform_indices = @transform_0, window_bounds = array<i64: 8, 8>}, {pipeline_mode = #tpu.pipeline_mode<synchronous>, transform_indices = @transform_1, window_bounds = array<i64: 32, 16>}, {transform_indices = @transform_2, window_bounds = array<i64: 1, 8>}]} {
    %c0 = arith.constant 0 : index
    %c0_0 = arith.constant 0 : index
    %0 = vector.load %arg2[%c0, %c0_0] : memref<32x16xf32, #tpu.memory_space<vmem>>, vector<16x8xf32>
    %c16 = arith.constant 16 : index
    %c0_1 = arith.constant 0 : index
    %1 = vector.load %arg2[%c16, %c0_1] : memref<32x16xf32, #tpu.memory_space<vmem>>, vector<8x16xf32>
    %c24 = arith.constant 24 : index
    %c0_2 = arith.constant 0 : index
    %2 = vector.load %arg2[%c24, %c0_2] : memref<32x16xf32, #tpu.memory_space<vmem>>, vector<1x8xf32>
    %c0_3 = arith.constant 0 : index
    %c8 = arith.constant 8 : index
    %3 = vector.load %arg2[%c0_3, %c8] : memref<32x16xf32, #tpu.memory_space<vmem>>, vector<16x1xf32>
    %c0_4 = arith.constant 0 : index
    %c9 = arith.constant 9 : index
    %4 = vector.load %arg2[%c0_4, %c9] : memref<32x16xf32, #tpu.memory_space<vmem>>, vector<8x1xf32>
    %c0_5 = arith.constant 0 : index
    %c10 = arith.constant 10 : index
    %5 = vector.load %arg2[%c0_5, %c10] : memref<32x16xf32, #tpu.memory_space<vmem>>, vector<1x1xf32>
    %c0_6 = arith.constant 0 : index
    %c0_7 = arith.constant 0 : index
    %6 = vector.load %arg1[%c0_6, %c0_7] : memref<8x8xf32, #tpu.memory_space<vmem>>, vector<8x8xf32>
    %cst = arith.constant dense<0.000000e+00> : vector<16x8xf32>
    %7 = tpu.matmul %0, %6, %cst {dimension_numbers = #tpu.dot_dimension_numbers<[1], [1], [0], [0], [0, 0, 1, 0], [], []>} : vector<16x8xf32>, vector<8x8xf32>, vector<16x8xf32> -> vector<16x8xf32>
    %8 = vector.broadcast %3 : vector<16x1xf32> to vector<16x8xf32>
    %9 = arith.addf %7, %8 : vector<16x8xf32>
    %cst_8 = arith.constant 0.000000e+00 : f32
    %10 = vector.broadcast %cst_8 : f32 to vector<16x8xf32>
    %11 = arith.maximumf %9, %10 : vector<16x8xf32>
    %cst_9 = arith.constant dense<0.000000e+00> : vector<8x8xf32>
    %12 = tpu.matmul %1, %11, %cst_9 {dimension_numbers = #tpu.dot_dimension_numbers<[1], [0], [0], [1], [0, 0, 1, 1], [], []>} : vector<8x16xf32>, vector<16x8xf32>, vector<8x8xf32> -> vector<8x8xf32>
    %13 = vector.broadcast %4 : vector<8x1xf32> to vector<8x8xf32>
    %14 = arith.addf %12, %13 : vector<8x8xf32>
    %cst_10 = arith.constant 0.000000e+00 : f32
    %15 = vector.broadcast %cst_10 : f32 to vector<8x8xf32>
    %16 = arith.maximumf %14, %15 : vector<8x8xf32>
    %cst_11 = arith.constant dense<0.000000e+00> : vector<1x8xf32>
    %17 = tpu.matmul %2, %16, %cst_11 {dimension_numbers = #tpu.dot_dimension_numbers<[1], [0], [0], [1], [0, 0, 1, 1], [], []>} : vector<1x8xf32>, vector<8x8xf32>, vector<1x8xf32> -> vector<1x8xf32>
    %18 = vector.broadcast %5 : vector<1x1xf32> to vector<1x8xf32>
    %19 = arith.addf %17, %18 : vector<1x8xf32>
    %cst_12 = arith.constant 0.000000e+00 : f32
    %20 = vector.broadcast %cst_12 : f32 to vector<1x8xf32>
    %21 = arith.subf %20, %19 : vector<1x8xf32>
    %22 = math.exp %21 : vector<1x8xf32>
    %cst_13 = arith.constant 1.000000e+00 : f32
    %23 = vector.broadcast %cst_13 : f32 to vector<1x8xf32>
    %24 = arith.addf %23, %22 : vector<1x8xf32>
    %25 = tpu.reciprocal %24 {approx = true} : vector<1x8xf32> -> vector<1x8xf32>
    %c0_14 = arith.constant 0 : index
    %c0_15 = arith.constant 0 : index
    %26 = vector.load %arg3[%c0_14, %c0_15] : memref<1x8xf32, #tpu.memory_space<vmem>>, vector<1x8xf32>
    tpu.vector_store %arg3[%c0_14, %c0_15], %25 {strides = array<i32>} : memref<1x8xf32, #tpu.memory_space<vmem>>, vector<1x8xf32>,
    return
  }
  func.func @transform_0(%arg0: i32) -> (i32, i32) {
    %c0_i32 = arith.constant 0 : i32
    %c0_i32_0 = arith.constant 0 : i32
    return %arg0, %c0_i32 : i32, i32
  }
  func.func @transform_1(%arg0: i32) -> (i32, i32) {
    %c0_i32 = arith.constant 0 : i32
    %c0_i32_0 = arith.constant 0 : i32
    %c0_i32_1 = arith.constant 0 : i32
    return %c0_i32, %c0_i32_0 : i32, i32
  }
  func.func @transform_2(%arg0: i32) -> (i32, i32) {
    %c0_i32 = arith.constant 0 : i32
    %c0_i32_0 = arith.constant 0 : i32
    return %c0_i32, %arg0 : i32, i32
  }
}

</mosaic_0001>

<llo_original>
// kernel: tpu_custom_call.1
$region0: #{tpu_custom_call.1}
  #allocation0 [shape = 'u32[]', space=smem, size = 0x4, offset = 0x4, fixed_abs, tag = 'smem constant byte address 0x4 - core index']
  #allocation1 [shape = 'u32[144,128]{1,0:T(1,128)}', space=vmem, size = 0x12000, scoped, tag = 'internal scratch']
  %s0 = inlined_call_operand.vmem [shape: f32[8,8], index: 0, kind: input, shape index: {}]
  %s1 = inlined_call_operand.vmem [shape: f32[32,16], index: 1, kind: input, shape index: {}]
  %s2 = inlined_call_operand.hbm [shape: f32[1,8], index: 2, kind: output, shape index: {}]
  %s3 = sld [smem:[#allocation0]]
  $region18: #{tpu_custom_call.1} parent=0
    _
  %s5 = ssub.s32 1, %s3
  %s6 = scalar_select 0, %s5, %s3
  $region1: #{tpu_custom_call.1} parent=0
    #allocation2 [shape = 'u8[512]{0}', space=vmem, size = 0x400, scoped, tag = 'output window, operand 0, single buffered']
    #allocation3 [shape = 's32[1]{0}', space=sflag, size = 0x4, scoped, tag = 'scoped memory for tpu_custom_call.1']
    %7 = vsyncpa [#allocation3], 0
    // Predicated region
    $region2: #{tpu_custom_call.1} parent=1 // pred_check
      _
    $region3: #{tpu_custom_call.1} parent=1 // pred_check_branch
      %9 = sbr.rel (0) target = $region5
    $region4: #{tpu_custom_call.1} parent=1 // pred_region
      _
    $region5: #{tpu_custom_call.1} parent=1 // pred_fallthru
      _
    // Predicated region
    $region6: #{tpu_custom_call.1} parent=1 // pred_check
      _
    $region7: #{tpu_custom_call.1} parent=1 // pred_check_branch
      %11 = sbr.rel (0) target = $region9
    $region8: #{tpu_custom_call.1} parent=1 // pred_region
      _
    $region9: #{tpu_custom_call.1} parent=1 // pred_fallthru
      _
    %v12 = vld [vmem:[%s1] sm:$0xff]
    %v13 = vld [vmem:[%s1 + $0x8] sm:$0xff]
    %v14 = vld [vmem:[%s1 + $0x10] sm:$0xff]
    %v15 = vld [vmem:[%s1 + $0x18] sm:$0x1]
    %v16 = vld [vmem:[%s1] sm:$0x1]
    %v17 = vld [vmem:[%s0] sm:$0xff]
    %19 = vset.pattern.permute.xlu0 8
    %20 = vperm.xlu0 %19, %v12
    %v21 = vpop.permute.xlu0 %20
    %24 = vset.pattern.permute.xlu0 8
    %25 = vperm.xlu0 %24, %v13
    %v26 = vpop.permute.xlu0 %25
    %vm28 = vcmask 64512
    %v29 = vsel %vm28, %v12, 0
    %v31 = vsel %vm28, %v13, 0
    %v34 = vsel %vm28, %v17, 0
    %36 = vmatprep.subr.mxu0 0.0
    %37 = vmatpush1.xpose.msra.mxu0 0.0
    %38 = vmatprep.subr.mxu0 0.0
    %39 = vmatpush1.xpose.msra.mxu0 0.0
    %40 = vmatprep.subr.mxu0 0.0
    %41 = vmatpush1.xpose.msra.mxu0 0.0
    %42 = vmatprep.subr.mxu0 0.0
    %43 = vmatpush1.xpose.msra.mxu0 0.0
    %44 = vmatprep.subr.mxu0 0.0
    %45 = vmatpush1.xpose.msra.mxu0 0.0
    %46 = vmatprep.subr.mxu0 0.0
    %47 = vmatpush1.xpose.msra.mxu0 0.0
    %48 = vmatprep.subr.mxu0 0.0
    %49 = vmatpush1.xpose.msra.mxu0 0.0
    %50 = vmatprep.subr.mxu0 0.0
    %51 = vmatpush1.xpose.msra.mxu0 0.0
    %52 = vmatprep.subr.mxu0 0.0
    %53 = vmatpush1.xpose.msra.mxu0 0.0
    %54 = vmatprep.subr.mxu0 0.0
    %55 = vmatpush1.xpose.msra.mxu0 0.0
    %56 = vmatprep.subr.mxu0 0.0
    %57 = vmatpush1.xpose.msra.mxu0 0.0
    %58 = vmatprep.subr.mxu0 0.0
    %59 = vmatpush1.xpose.msra.mxu0 0.0
    %60 = vmatprep.subr.mxu0 0.0
    %61 = vmatpush1.xpose.msra.mxu0 0.0
    %62 = vmatprep.subr.mxu0 0.0
    %63 = vmatpush1.xpose.msra.mxu0 0.0
    %64 = vmatprep.subr.mxu0 0.0
    %65 = vmatpush1.xpose.msra.mxu0 0.0
    %66 = vmatprep.subr.mxu0 0.0
    %67 = vmatpush1.xpose.msra.mxu0 %v34
    %68 = vmatprep.subr.mxu0 0.0
    %69 = vmatpush2.xpose.msra.mxu0 0.0
    %70 = vmatprep.subr.mxu0 0.0
    %71 = vmatpush2.xpose.msra.mxu0 0.0
    %72 = vmatprep.subr.mxu0 0.0
    %73 = vmatpush2.xpose.msra.mxu0 0.0
    %74 = vmatprep.subr.mxu0 0.0
    %75 = vmatpush2.xpose.msra.mxu0 0.0
    %76 = vmatprep.subr.mxu0 0.0
    %77 = vmatpush2.xpose.msra.mxu0 0.0
    %78 = vmatprep.subr.mxu0 0.0
    %79 = vmatpush2.xpose.msra.mxu0 0.0
    %80 = vmatprep.subr.mxu0 0.0
    %81 = vmatpush2.xpose.msra.mxu0 0.0
    %82 = vmatprep.subr.mxu0 0.0
    %83 = vmatpush2.xpose.msra.mxu0 0.0
    %84 = vmatprep.subr.mxu0 0.0
    %85 = vmatpush2.xpose.msra.mxu0 0.0
    %86 = vmatprep.subr.mxu0 0.0
    %87 = vmatpush2.xpose.msra.mxu0 0.0
    %88 = vmatprep.subr.mxu0 0.0
    %89 = vmatpush2.xpose.msra.mxu0 0.0
    %90 = vmatprep.subr.mxu0 0.0
    %91 = vmatpush2.xpose.msra.mxu0 0.0
    %92 = vmatprep.subr.mxu0 0.0
    %93 = vmatpush2.xpose.msra.mxu0 0.0
    %94 = vmatprep.subr.mxu0 0.0
    %95 = vmatpush2.xpose.msra.mxu0 0.0
    %96 = vmatprep.subr.mxu0 0.0
    %97 = vmatpush2.xpose.msra.mxu0 0.0
    %98 = vmatprep.subr.mxu0 0.0
    %99 = vmatpush2.xpose.msra.mxu0 0.0
    %100 = vmatprep.mubr.f32.mxu0 0.0
    %101 = vmatmul.mubr.f32.gmra.mxu0 %v29
    %v102 = vpop.f32.mrf.mxu0
    %v103 = vadd.f32 %v21, %v102
    %v104 = vpop.f32.mrf.mxu0
    %105 = vmatprep.mubr.f32.mxu0 0.0
    %106 = vmatmul.mubr.f32.gmra.mxu0 %v31
    %v107 = vpop.f32.mrf.mxu0
    %v108 = vadd.f32 %v26, %v107
    %v109 = vpop.f32.mrf.mxu0
    %110 = vdwg.mxu0
    %v111 = vmax.f32 %v103, 0.0
    %v112 = vmax.f32 %v108, 0.0
    %113 = vset.pattern.permute.xlu0 9
    %114 = vperm.xlu0 %113, %v12
    %v115 = vpop.permute.xlu0 %114
    %vm117 = vcmask 130048
    %v119 = vsel %vm117, %v14, 0
    %121 = vmatprep.subr.mxu0 0.0
    %122 = vmatpush1.msra.mxu0 0.0
    %123 = vmatprep.subr.mxu0 0.0
    %124 = vmatpush1.msra.mxu0 0.0
    %125 = vmatprep.subr.mxu0 0.0
    %126 = vmatpush1.msra.mxu0 0.0
    %127 = vmatprep.subr.mxu0 0.0
    %128 = vmatpush1.msra.mxu0 0.0
    %129 = vmatprep.subr.mxu0 0.0
    %130 = vmatpush1.msra.mxu0 0.0
    %131 = vmatprep.subr.mxu0 0.0
    %132 = vmatpush1.msra.mxu0 0.0
    %133 = vmatprep.subr.mxu0 0.0
    %134 = vmatpush1.msra.mxu0 0.0
    %135 = vmatprep.subr.mxu0 0.0
    %136 = vmatpush1.msra.mxu0 0.0
    %137 = vmatprep.subr.mxu0 0.0
    %138 = vmatpush1.msra.mxu0 0.0
    %139 = vmatprep.subr.mxu0 0.0
    %140 = vmatpush1.msra.mxu0 0.0
    %141 = vmatprep.subr.mxu0 0.0
    %142 = vmatpush1.msra.mxu0 0.0
    %143 = vmatprep.subr.mxu0 0.0
    %144 = vmatpush1.msra.mxu0 0.0
    %145 = vmatprep.subr.mxu0 0.0
    %146 = vmatpush1.msra.mxu0 0.0
    %147 = vmatprep.subr.mxu0 0.0
    %148 = vmatpush1.msra.mxu0 0.0
    %149 = vmatprep.subr.mxu0 0.0
    %150 = vmatpush1.msra.mxu0 %v112
    %151 = vmatprep.subr.mxu0 0.0
    %152 = vmatpush1.msra.mxu0 %v111
    %153 = vmatprep.subr.mxu0 0.0
    %154 = vmatpush2.msra.mxu0 0.0
    %155 = vmatprep.subr.mxu0 0.0
    %156 = vmatpush2.msra.mxu0 0.0
    %157 = vmatprep.subr.mxu0 0.0
    %158 = vmatpush2.msra.mxu0 0.0
    %159 = vmatprep.subr.mxu0 0.0
    %160 = vmatpush2.msra.mxu0 0.0
    %161 = vmatprep.subr.mxu0 0.0
    %162 = vmatpush2.msra.mxu0 0.0
    %163 = vmatprep.subr.mxu0 0.0
    %164 = vmatpush2.msra.mxu0 0.0
    %165 = vmatprep.subr.mxu0 0.0
    %166 = vmatpush2.msra.mxu0 0.0
    %167 = vmatprep.subr.mxu0 0.0
    %168 = vmatpush2.msra.mxu0 0.0
    %169 = vmatprep.subr.mxu0 0.0
    %170 = vmatpush2.msra.mxu0 0.0
    %171 = vmatprep.subr.mxu0 0.0
    %172 = vmatpush2.msra.mxu0 0.0
    %173 = vmatprep.subr.mxu0 0.0
    %174 = vmatpush2.msra.mxu0 0.0
    %175 = vmatprep.subr.mxu0 0.0
    %176 = vmatpush2.msra.mxu0 0.0
    %177 = vmatprep.subr.mxu0 0.0
    %178 = vmatpush2.msra.mxu0 0.0
    %179 = vmatprep.subr.mxu0 0.0
    %180 = vmatpush2.msra.mxu0 0.0
    %181 = vmatprep.subr.mxu0 0.0
    %182 = vmatpush2.msra.mxu0 0.0
    %183 = vmatprep.subr.mxu0 0.0
    %184 = vmatpush2.msra.mxu0 0.0
    %185 = vmatprep.mubr.f32.mxu0 0.0
    %186 = vmatmul.mubr.f32.gmra.mxu0 %v119
    %v187 = vpop.f32.mrf.mxu0
    %v188 = vadd.f32 %v115, %v187
    %v189 = vpop.f32.mrf.mxu0
    %190 = vdwg.mxu0
    %v191 = vmax.f32 %v188, 0.0
    %193 = vset.pattern.permute.xlu0 10
    %194 = vperm.xlu0 %193, %v16
    %v195 = vpop.permute.xlu0 %194
    %v198 = vsel %vm28, %v15, 0
    %200 = vmatprep.subr.mxu0 0.0
    %201 = vmatpush1.msra.mxu0 0.0
    %202 = vmatprep.subr.mxu0 0.0
    %203 = vmatpush1.msra.mxu0 0.0
    %204 = vmatprep.subr.mxu0 0.0
    %205 = vmatpush1.msra.mxu0 0.0
    %206 = vmatprep.subr.mxu0 0.0
    %207 = vmatpush1.msra.mxu0 0.0
    %208 = vmatprep.subr.mxu0 0.0
    %209 = vmatpush1.msra.mxu0 0.0
    %210 = vmatprep.subr.mxu0 0.0
    %211 = vmatpush1.msra.mxu0 0.0
    %212 = vmatprep.subr.mxu0 0.0
    %213 = vmatpush1.msra.mxu0 0.0
    %214 = vmatprep.subr.mxu0 0.0
    %215 = vmatpush1.msra.mxu0 0.0
    %216 = vmatprep.subr.mxu0 0.0
    %217 = vmatpush1.msra.mxu0 0.0
    %218 = vmatprep.subr.mxu0 0.0
    %219 = vmatpush1.msra.mxu0 0.0
    %220 = vmatprep.subr.mxu0 0.0
    %221 = vmatpush1.msra.mxu0 0.0
    %222 = vmatprep.subr.mxu0 0.0
    %223 = vmatpush1.msra.mxu0 0.0
    %224 = vmatprep.subr.mxu0 0.0
    %225 = vmatpush1.msra.mxu0 0.0
    %226 = vmatprep.subr.mxu0 0.0
    %227 = vmatpush1.msra.mxu0 0.0
    %228 = vmatprep.subr.mxu0 0.0
    %229 = vmatpush1.msra.mxu0 0.0
    %230 = vmatprep.subr.mxu0 0.0
    %231 = vmatpush1.msra.mxu0 %v191
    %232 = vmatprep.subr.mxu0 0.0
    %233 = vmatpush2.msra.mxu0 0.0
    %234 = vmatprep.subr.mxu0 0.0
    %235 = vmatpush2.msra.mxu0 0.0
    %236 = vmatprep.subr.mxu0 0.0
    %237 = vmatpush2.msra.mxu0 0.0
    %238 = vmatprep.subr.mxu0 0.0
    %239 = vmatpush2.msra.mxu0 0.0
    %240 = vmatprep.subr.mxu0 0.0
    %241 = vmatpush2.msra.mxu0 0.0
    %242 = vmatprep.subr.mxu0 0.0
    %243 = vmatpush2.msra.mxu0 0.0
    %244 = vmatprep.subr.mxu0 0.0
    %245 = vmatpush2.msra.mxu0 0.0
    %246 = vmatprep.subr.mxu0 0.0
    %247 = vmatpush2.msra.mxu0 0.0
    %248 = vmatprep.subr.mxu0 0.0
    %249 = vmatpush2.msra.mxu0 0.0
    %250 = vmatprep.subr.mxu0 0.0
    %251 = vmatpush2.msra.mxu0 0.0
    %252 = vmatprep.subr.mxu0 0.0
    %253 = vmatpush2.msra.mxu0 0.0
    %254 = vmatprep.subr.mxu0 0.0
    %255 = vmatpush2.msra.mxu0 0.0
    %256 = vmatprep.subr.mxu0 0.0
    %257 = vmatpush2.msra.mxu0 0.0
    %258 = vmatprep.subr.mxu0 0.0
    %259 = vmatpush2.msra.mxu0 0.0
    %260 = vmatprep.subr.mxu0 0.0
    %261 = vmatpush2.msra.mxu0 0.0
    %262 = vmatprep.subr.mxu0 0.0
    %263 = vmatpush2.msra.mxu0 0.0
    %264 = vmatprep.mubr.f32.mxu0 0.0
    %265 = vmatmul.mubr.f32.gmra.mxu0 %v198
    %v266 = vpop.f32.mrf.mxu0
    %v267 = vadd.f32 %v195, %v266
    %v268 = vpop.f32.mrf.mxu0
    %269 = vdwg.mxu0
    %v270 = vsub.f32 0.0, %v267
    %v271 = vmul.f32 %v270, 1.442695
    %v272 = vpow.pop %v271
    %v273 = vadd.f32 %v272, 1.0
    %v274 = vrcp.pop %v273
    %vm275 = vcmask 57344
    %276 = vst.msk [vmem:[#allocation2] sm:$0x1] %vm275, %v274
    // Predicated region
    $region10: #{tpu_custom_call.1} parent=1 // pred_check
      _
    $region11: #{tpu_custom_call.1} parent=1 // pred_check_branch
      %278 = sbr.rel (0) target = $region13
    $region12: #{tpu_custom_call.1} parent=1 // pred_region
      %s280 = ssub.s32 16, 16
      %281 = vsyncadd [#allocation3], %s280
      %s283 = sshll.u32 [#allocation2], 4
      %s284 = int_to_ptr.vmem [resolvable:$true] %s283
      %286 = dma.vmem_to_hbm [thread:$0]  %s284, 16, %s2, [#allocation3]
    $region13: #{tpu_custom_call.1} parent=1 // pred_fallthru
      _
    // Predicated region
    $region14: #{tpu_custom_call.1} parent=1 // pred_check
      _
    $region15: #{tpu_custom_call.1} parent=1 // pred_check_branch
      %288 = sbr.rel (0) target = $region17
    $region16: #{tpu_custom_call.1} parent=1 // pred_region
      %289 = dma.done [#allocation3], 16
    $region17: #{tpu_custom_call.1} parent=1 // pred_fallthru
      _
    %290 = vsyncpa [#allocation3], 1

</llo_original>
